<compile_context>
chip_gen: v6e
topology: v6e:2x2x1
jax: 0.10.0
libtpu: 0.0.40
codegen_flags: <defaults>
</compile_context>

<pallas_src>
import jax
import jax.numpy as jnp
from jax.experimental import pallas as pl
from jax.experimental.pallas import tpu as pltpu

_LANES = 128
_BYTES_PER_ROW = _LANES * 4  # one lane-dense f32 row


def _affine_kernel(w_ref, b_ref, x_ref, o_ref):
    # w/b are SMEM scalars read once per grid step; the affine transform is
    # pure VPU work on a lane-dense (tile_rows, 128) tile (full-width vst).
    o_ref[...] = x_ref[...] * w_ref[0] + b_ref[0]


def _round_up(x, m):
    return (x + m - 1) // m * m


def _max_tile_rows():
    """Generation-aware per-buffer tile size.

    v7x-class (64 MiB physical VMEM, 3.2 TB/s HBM): 4 MiB/buffer -> the
    double-buffered in+out working set is 16 MiB, inside the 32 MiB scoped
    default.  v5e/v6e (128 MiB physical) or unknown: 2 MiB/buffer -> 8 MiB
    working set, inside v5e's 16 MiB scoped default.
    """
    try:
        phys_vmem = int(pltpu.get_tpu_info().vmem_capacity_bytes)
    except Exception:
        phys_vmem = 0
    per_buffer = (4 << 20) if (phys_vmem and phys_vmem <= (64 << 20)) else (2 << 20)
    return per_buffer // _BYTES_PER_ROW  # 8192 or 4096 rows


def _pick_tile_rows(rows):
    if rows <= 8:
        return rows  # single tiny block (full-dim sublane block is legal)
    # Keep at least 2 grid steps when there is enough work so the "parallel"
    # grid axis can shard across v7x's two TensorCores.
    half = _round_up(pl.cdiv(rows, 2), 8)
    return max(8, min(_max_tile_rows(), half))


def linear_regression_forward(x, weight, bias):
    """y = x @ W^T + b with W: (1, 1), b: (1,).  x: (N, 1) -> (N, 1) float32."""
    n, f = x.shape
    assert f == 1 and weight.shape == (1, 1) and bias.shape == (1,)

    if x.dtype != jnp.float32:
        x = x.astype(jnp.float32)
    w_scalar = weight.reshape((1,)).astype(jnp.float32)
    b_scalar = bias.reshape((1,)).astype(jnp.float32)

    if n == 0 or n % _LANES != 0:
        # Ragged or tiny batch: a single fused XLA elementwise op moves exactly
        # read+write of x/y with no pad copy, no slice copy, and no kernel
        # launch / grid-step overhead (per perf review).
        return x * w_scalar[0] + b_scalar[0]

    rows = n // _LANES
    x2d = x.reshape((rows, _LANES))  # contiguous reshape: lane-dense, no copy

    tile_rows = _pick_tile_rows(rows)
    grid = (pl.cdiv(rows, tile_rows),)

    y2d = pl.pallas_call(
        _affine_kernel,
        out_shape=jax.ShapeDtypeStruct((rows, _LANES), jnp.float32),
        grid=grid,
        in_specs=[
            pl.BlockSpec(memory_space=pltpu.SMEM),                # weight scalar
            pl.BlockSpec(memory_space=pltpu.SMEM),                # bias scalar
            pl.BlockSpec((tile_rows, _LANES), lambda i: (i, 0)),  # x tile
        ],
        out_specs=pl.BlockSpec((tile_rows, _LANES), lambda i: (i, 0)),
        compiler_params=pltpu.CompilerParams(
            dimension_semantics=("parallel",),
        ),
    )(w_scalar, b_scalar, x2d)

    # Free view back to the module's (N, 1) output shape -- no slice, no pad.
    return y2d.reshape((n, 1))


if __name__ == "__main__":
    key = jax.random.PRNGKey(0)
    kx, kw, kb, kx2 = jax.random.split(key, 4)

    # Deterministic parameters (matches nn.Linear(1, 1) shapes).
    weight = jax.random.normal(kw, (1, 1), dtype=jnp.float32) * 0.5
    bias = jax.random.normal(kb, (1,), dtype=jnp.float32) * 0.1

    # Lane-dense Pallas path: batch is a multiple of 128 -> no pad, no slice,
    # 2 grid steps (tile_rows = 16 rows of 128 lanes each).
    x_big = jax.random.normal(kx, (4096, 1), dtype=jnp.float32)
    y_big = linear_regression_forward(x_big, weight, bias)
    jax.block_until_ready(y_big)
    ref_big = x_big @ weight.T + bias
    assert y_big.shape == ref_big.shape
    assert jnp.allclose(y_big, ref_big, atol=1e-6, rtol=1e-6)

    # Ragged / tiny-batch fast path (single fused XLA elementwise op).
    x_small = jax.random.normal(kx2, (8, 1), dtype=jnp.float32)
    y_small = linear_regression_forward(x_small, weight, bias)
    jax.block_until_ready(y_small)
    ref_small = x_small @ weight.T + bias
    assert y_small.shape == ref_small.shape
    assert jnp.allclose(y_small, ref_small, atol=1e-6, rtol=1e-6)

    print("KERNEL_OK")
</pallas_src>

<mosaic_0001>
module attributes {stable_mosaic.version = 11 : i64} {
  func.func @_affine_kernel(%arg0: i32, %arg1: memref<1xf32, #tpu.memory_space<smem>>, %arg2: memref<1xf32, #tpu.memory_space<smem>>, %arg3: memref<16x128xf32, #tpu.memory_space<vmem>>, %arg4: memref<16x128xf32, #tpu.memory_space<vmem>>) attributes {dimension_semantics = [#tpu.dimension_semantics<parallel>], iteration_bounds = array<i64: 2>, scalar_prefetch = 0 : i64, scratch_operands = 0 : i64, tpu.core_type = #tpu.core_type<tc>, window_params = [{transform_indices = @transform_0, window_bounds = array<i64: 1>}, {transform_indices = @transform_1, window_bounds = array<i64: 1>}, {transform_indices = @transform_2, window_bounds = array<i64: 16, 128>}, {transform_indices = @transform_3, window_bounds = array<i64: 16, 128>}]} {
    %c0 = arith.constant 0 : index
    %c0_0 = arith.constant 0 : index
    %0 = vector.load %arg3[%c0, %c0_0] : memref<16x128xf32, #tpu.memory_space<vmem>>, vector<16x128xf32>
    %c0_1 = arith.constant 0 : index
    %1 = memref.load %arg1[%c0_1] : memref<1xf32, #tpu.memory_space<smem>>
    %2 = vector.broadcast %1 : f32 to vector<16x128xf32>
    %3 = arith.mulf %0, %2 : vector<16x128xf32>
    %c0_2 = arith.constant 0 : index
    %4 = memref.load %arg2[%c0_2] : memref<1xf32, #tpu.memory_space<smem>>
    %5 = vector.broadcast %4 : f32 to vector<16x128xf32>
    %6 = arith.addf %3, %5 : vector<16x128xf32>
    %c0_3 = arith.constant 0 : index
    %c0_4 = arith.constant 0 : index
    %7 = vector.load %arg4[%c0_3, %c0_4] : memref<16x128xf32, #tpu.memory_space<vmem>>, vector<16x128xf32>
    tpu.vector_store %arg4[%c0_3, %c0_4], %6 {strides = array<i32>} : memref<16x128xf32, #tpu.memory_space<vmem>>, vector<16x128xf32>,
    return
  }
  func.func @transform_0(%arg0: i32) -> i32 {
    %c0_i32 = arith.constant 0 : i32
    %c0_i32_0 = arith.constant 0 : i32
    return %c0_i32 : i32
  }
  func.func @transform_1(%arg0: i32) -> i32 {
    %c0_i32 = arith.constant 0 : i32
    %c0_i32_0 = arith.constant 0 : i32
    return %c0_i32 : i32
  }
  func.func @transform_2(%arg0: i32) -> (i32, i32) {
    %c0_i32 = arith.constant 0 : i32
    %c0_i32_0 = arith.constant 0 : i32
    return %arg0, %c0_i32 : i32, i32
  }
  func.func @transform_3(%arg0: i32) -> (i32, i32) {
    %c0_i32 = arith.constant 0 : i32
    %c0_i32_0 = arith.constant 0 : i32
    return %arg0, %c0_i32 : i32, i32
  }
}

</mosaic_0001>

<llo_original>
// kernel: tpu_custom_call.1
$region0: #{tpu_custom_call.1}
  #allocation0 [shape = 'u32[]', space=smem, size = 0x4, offset = 0x4, fixed_abs, tag = 'smem constant byte address 0x4 - core index']
  #allocation1 [shape = 'u32[144,128]{1,0:T(1,128)}', space=vmem, size = 0x12000, scoped, tag = 'internal scratch']
  #allocation2 [shape = 'f32[1]{0:T(128)S(6)}', space=smem, size = 0x200, scoped, tag = 'scoped memory for tpu_custom_call.1']
  #allocation3 [shape = 'f32[1]{0:T(128)S(6)}', space=smem, size = 0x200, scoped, tag = 'scoped memory for tpu_custom_call.1']
  %s0 = inlined_call_operand.<no memory space> [shape: f32[1], index: 0, kind: input, shape index: {}]
  %s1 = inlined_call_operand.<no memory space> [shape: f32[1], index: 1, kind: input, shape index: {}]
  %s2 = inlined_call_operand.hbm [shape: f32[32,128], index: 2, kind: input, shape index: {}]
  %s3 = inlined_call_operand.hbm [shape: f32[32,128], index: 3, kind: output, shape index: {}]
  %s4 = sld [smem:[#allocation0]]
  $region49: #{tpu_custom_call.1} parent=0
    _
  %s6 = ssub.s32 1, %s4
  %s7 = scalar_select 0, %s6, %s4
  %8 = sst [smem:[#allocation2]] %s0
  %9 = sst [smem:[#allocation3]] %s1
  $region1: #{tpu_custom_call.1} parent=0
    #allocation4 [shape = 'u8[16384]{0}', space=vmem, size = 0x4000, scoped, tag = 'input window, operand 2']
    #allocation5 [shape = 's32[2]{0}', space=sflag, size = 0x8, scoped, tag = 'scoped memory for tpu_custom_call.1']
    #allocation6 [shape = 's32[2]{0}', space=sflag, size = 0x8, scoped, tag = 'scoped memory for tpu_custom_call.1']
    #allocation7 [shape = 'u8[16384]{0}', space=vmem, size = 0x4000, scoped, tag = 'output window, operand 0']
    %10 = vsyncpa [#allocation5], 0
    %s11 = scalar_lea.sflag [#allocation5], 1
    %12 = vsyncpa %s11, 0
    %13 = vsyncpa [#allocation6], 0
    %s14 = scalar_lea.sflag [#allocation6], 1
    %15 = vsyncpa %s14, 0
    loop: start=0, step=1, limit=4
    $region2: #{tpu_custom_call.1} parent=1 // loop_pre_header
      _
    $region3: #{tpu_custom_call.1} parent=1 // loop_header
      %s17 = sphi 0, %s21
      %p18 = scmp.ge.s32.totalorder %s17, 4
      %s25 = sphi 0, %s25
      %s27 = sphi 0, %s25
      %s28 = sphi 0, %s27
      %s42 = sphi 0, %s28
      %s46 = sphi 0, %s46
      %s48 = sphi 0, %s46
      %s49 = sphi 0, %s48
      %s63 = sphi 0, %s49
      %s69 = sphi 0, %s71
      %s72 = sphi 0, %s69
      %s73 = sphi 0, %s72
      %s89 = sphi 0, %s73
      %s95 = sphi 0, %s97
      %s98 = sphi 0, %s95
      %s99 = sphi 0, %s98
      %s115 = sphi 0, %s99
    $region4: #{tpu_custom_call.1} parent=1 // loop_header_branch
      %20 = sbr.rel (%p18) target = $region8
    $region5: #{tpu_custom_call.1} parent=1 // loop_body
      %s22 = ssub.s32 %s17, 1
      %s23 = ssub.s32 %s17, 2
      %s24 = sadd.s32 %s17, 1
      %s26 = sadd.s32 %s25, 1
      %p29 = scmp.eq.s32.totalorder %s17, 1
      %p30 = scmp.ne.s32.totalorder %s25, %s27
      %p31 = scmp.eq.s32.totalorder %s17, 0
      %p32 = por %p30, %p31
      %p33 = scmp.ne.s32.totalorder %s25, %s27
      %p34 = scmp.eq.s32.totalorder %s22, 1
      %p35 = por %p33, %p34
      %p36 = scmp.ne.s32.totalorder %s27, %s28
      %p37 = scmp.eq.s32.totalorder %s22, 0
      %p38 = por %p36, %p37
      %p39 = scmp.ne.s32.totalorder %s27, %s28
      %p40 = scmp.eq.s32.totalorder %s23, 1
      %p41 = por %p39, %p40
      %p43 = scmp.ne.s32.totalorder %s28, %s42
      %p44 = scmp.eq.s32.totalorder %s23, 0
      %p45 = por %p43, %p44
      %s47 = sadd.s32 %s46, 1
      %p50 = scmp.eq.s32.totalorder %s17, 1
      %p51 = scmp.ne.s32.totalorder %s46, %s48
      %p52 = scmp.eq.s32.totalorder %s17, 0
      %p53 = por %p51, %p52
      %p54 = scmp.ne.s32.totalorder %s46, %s48
      %p55 = scmp.eq.s32.totalorder %s22, 1
      %p56 = por %p54, %p55
      %p57 = scmp.ne.s32.totalorder %s48, %s49
      %p58 = scmp.eq.s32.totalorder %s22, 0
      %p59 = por %p57, %p58
      %p60 = scmp.ne.s32.totalorder %s48, %s49
      %p61 = scmp.eq.s32.totalorder %s23, 1
      %p62 = por %p60, %p61
      %p64 = scmp.ne.s32.totalorder %s49, %s63
      %p65 = scmp.eq.s32.totalorder %s23, 0
      %p66 = por %p64, %p65
      %s67 = ssub.s32 %s17, %s24
      %p68 = scmp.eq.s32.totalorder %s67, 0
      %s70 = sadd.s32 %s69, 1
      %s71 = scalar_select %p68, %s69, %s70
      %p74 = pneg %p68
      %p75 = scmp.eq.s32.totalorder %s17, 1
      %p76 = por %p74, %p75
      %p77 = scmp.ne.s32.totalorder %s69, %s72
      %p78 = scmp.eq.s32.totalorder %s17, 0
      %p79 = por %p77, %p78
      %p80 = scmp.ne.s32.totalorder %s69, %s72
      %p81 = scmp.eq.s32.totalorder %s22, 1
      %p82 = por %p80, %p81
      %p83 = scmp.ne.s32.totalorder %s72, %s73
      %p84 = scmp.eq.s32.totalorder %s22, 0
      %p85 = por %p83, %p84
      %p86 = scmp.ne.s32.totalorder %s72, %s73
      %p87 = scmp.eq.s32.totalorder %s23, 1
      %p88 = por %p86, %p87
      %p90 = scmp.ne.s32.totalorder %s73, %s89
      %p91 = scmp.eq.s32.totalorder %s23, 0
      %p92 = por %p90, %p91
      %s93 = ssub.s32 %s17, %s24
      %p94 = scmp.eq.s32.totalorder %s93, 0
      %s96 = sadd.s32 %s95, 1
      %s97 = scalar_select %p94, %s95, %s96
      %p100 = pneg %p94
      %p101 = scmp.eq.s32.totalorder %s17, 1
      %p102 = por %p100, %p101
      %p103 = scmp.ne.s32.totalorder %s95, %s98
      %p104 = scmp.eq.s32.totalorder %s17, 0
      %p105 = por %p103, %p104
      %p106 = scmp.ne.s32.totalorder %s95, %s98
      %p107 = scmp.eq.s32.totalorder %s22, 1
      %p108 = por %p106, %p107
      %p109 = scmp.ne.s32.totalorder %s98, %s99
      %p110 = scmp.eq.s32.totalorder %s22, 0
      %p111 = por %p109, %p110
      %p112 = scmp.ne.s32.totalorder %s98, %s99
      %p113 = scmp.eq.s32.totalorder %s23, 1
      %p114 = por %p112, %p113
      %p116 = scmp.ne.s32.totalorder %s99, %s115
      %p117 = scmp.eq.s32.totalorder %s23, 0
      %p118 = por %p116, %p117
      %p119 = scmp.le.s32.totalorder 1, %s17
      %p120 = scmp.lt.s32.totalorder %s17, 3
      %p121 = pnand %p119, %p120
      %p122 = pneg %p121
      // Predicated region
      $region9: #{tpu_custom_call.1} parent=5 // pred_check
        _
      $region10: #{tpu_custom_call.1} parent=5 // pred_check_branch
        %124 = sbr.rel (%p121) target = $region12
      $region11: #{tpu_custom_call.1} parent=5 // pred_region
        %s125 = ssub.s32 %s17, 1
        // Predicated region
        $region13: #{tpu_custom_call.1} parent=11 // pred_check
          %p126 = pneg %p38
        $region14: #{tpu_custom_call.1} parent=11 // pred_check_branch
          %128 = sbr.rel (%p126) target = $region16
        $region15: #{tpu_custom_call.1} parent=11 // pred_region
          _
        $region16: #{tpu_custom_call.1} parent=11 // pred_fallthru
          _
        // Predicated region
        $region17: #{tpu_custom_call.1} parent=11 // pred_check
          %p129 = pneg %p59
        $region18: #{tpu_custom_call.1} parent=11 // pred_check_branch
          %131 = sbr.rel (%p129) target = $region20
        $region19: #{tpu_custom_call.1} parent=11 // pred_region
          _
        $region20: #{tpu_custom_call.1} parent=11 // pred_fallthru
          _
      $region12: #{tpu_custom_call.1} parent=5 // pred_fallthru
        _
      %p132 = scmp.lt.s32.totalorder %s17, 2
      // Predicated region
      $region21: #{tpu_custom_call.1} parent=5 // pred_check
        %p133 = pneg %p132
      $region22: #{tpu_custom_call.1} parent=5 // pred_check_branch
        %135 = sbr.rel (%p133) target = $region24
      $region23: #{tpu_custom_call.1} parent=5 // pred_region
        // Predicated region
        $region25: #{tpu_custom_call.1} parent=23 // pred_check
          %p136 = pneg %p79
        $region26: #{tpu_custom_call.1} parent=23 // pred_check_branch
          %138 = sbr.rel (%p136) target = $region28
        $region27: #{tpu_custom_call.1} parent=23 // pred_region
          %s139 = sand.u32 %s69, 1
          %s140 = scalar_lea.sflag [#allocation5], %s139
          %s141 = sand.u32 %s69, 1
          %s142 = smul.addr %s141, 16
          %s143 = scalar_lea.vmem [#allocation4], %s142
          %s144 = smul.u32 2, %s17
          %s146 = ssub.s32 256, 256
          %147 = vsyncadd %s140, %s146
          %s148 = smul.addr %s144, 128
          %s149 = scalar_lea.hbm %s2, %s148
          %s150 = sshll.u32 %s143, 4
          %s151 = int_to_ptr.vmem [resolvable:$true] %s150
          %156 = dma.hbm_to_vmem [thread:$0]  %s149, 256, %s151, %s140, 128, 128, 8
        $region28: #{tpu_custom_call.1} parent=23 // pred_fallthru
          _
      $region24: #{tpu_custom_call.1} parent=5 // pred_fallthru
        _
      %p157 = scmp.le.s32.totalorder 1, %s17
      %p158 = scmp.lt.s32.totalorder %s17, 3
      %p159 = pnand %p157, %p158
      %p160 = pneg %p159
      // Predicated region
      $region29: #{tpu_custom_call.1} parent=5 // pred_check
        _
      $region30: #{tpu_custom_call.1} parent=5 // pred_check_branch
        %162 = sbr.rel (%p159) target = $region32
      $region31: #{tpu_custom_call.1} parent=5 // pred_region
        %s163 = ssub.s32 %s17, 1
        %s164 = sand.u32 %s72, 1
        %s165 = scalar_lea.sflag [#allocation5], %s164
        %s166 = sand.u32 %s72, 1
        %s167 = smul.addr %s166, 16
        %s168 = scalar_lea.vmem [#allocation4], %s167
        // Predicated region
        $region33: #{tpu_custom_call.1} parent=31 // pred_check
          %p169 = pneg %p85
        $region34: #{tpu_custom_call.1} parent=31 // pred_check_branch
          %171 = sbr.rel (%p169) target = $region36
        $region35: #{tpu_custom_call.1} parent=31 // pred_region
          %172 = dma.done %s165, 256
        $region36: #{tpu_custom_call.1} parent=31 // pred_fallthru
          _
        %p173 = pneg %p38
        %p174 = pneg %p35
        %p175 = pneg %p59
        %p176 = pneg %p56
        %s177 = sand.u32 %s72, 1
        %s178 = scalar_lea.sflag [#allocation5], %s177
        %s179 = sand.u32 %s72, 1
        %s180 = smul.addr %s179, 16
        %s181 = scalar_lea.vmem [#allocation4], %s180
        %p182 = pneg %p85
        %p183 = pneg %p82
        %p184 = pneg %p111
        %p185 = pneg %p108
        %s186 = sand.u32 %s98, 1
        %s187 = scalar_lea.sflag [#allocation6], %s186
        %s188 = sand.u32 %s98, 1
        %s189 = smul.addr %s188, 16
        %s190 = scalar_lea.vmem [#allocation7], %s189
        %s191 = smul.u32 2, %s22
        %s192 = smul.u32 2, %s22
        %v193 = vld [vmem:[%s168] sm:$0xff]
        %v194 = vld [vmem:[%s168 + $0x8] sm:$0xff]
        %s195 = sld [smem:[#allocation2]]
        %v196 = vstv %s195
        %v197 = vmul.f32 %v193, %v196
        %v198 = vmul.f32 %v194, %v196
        %s199 = sld [smem:[#allocation3]]
        %v200 = vstv %s199
        %v201 = vadd.f32 %v197, %v200
        %v202 = vadd.f32 %v198, %v200
        %203 = vst [vmem:[%s190] sm:$0xff] %v201
        %204 = vst [vmem:[%s190 + $0x8] sm:$0xff] %v202
        %s205 = sand.u32 %s98, 1
        %s206 = scalar_lea.sflag [#allocation6], %s205
        %s207 = sand.u32 %s98, 1
        %s208 = smul.addr %s207, 16
        %s209 = scalar_lea.vmem [#allocation7], %s208
        // Predicated region
        $region37: #{tpu_custom_call.1} parent=31 // pred_check
          %p210 = pneg %p108
        $region38: #{tpu_custom_call.1} parent=31 // pred_check_branch
          %212 = sbr.rel (%p210) target = $region40
        $region39: #{tpu_custom_call.1} parent=31 // pred_region
          %s213 = smul.u32 2, %s22
          %s215 = ssub.s32 256, 256
          %216 = vsyncadd %s206, %s215
          %s217 = smul.addr %s213, 128
          %s218 = scalar_lea.hbm %s3, %s217
          %s219 = sshll.u32 %s209, 4
          %s220 = int_to_ptr.vmem [resolvable:$true] %s219
          %225 = dma.vmem_to_hbm [thread:$0]  %s220, 256, %s218, %s206, 128, 128, 8
        $region40: #{tpu_custom_call.1} parent=31 // pred_fallthru
          _
      $region32: #{tpu_custom_call.1} parent=5 // pred_fallthru
        _
      %p226 = scmp.le.s32.totalorder 2, %s17
      // Predicated region
      $region41: #{tpu_custom_call.1} parent=5 // pred_check
        %p227 = pneg %p226
      $region42: #{tpu_custom_call.1} parent=5 // pred_check_branch
        %229 = sbr.rel (%p227) target = $region44
      $region43: #{tpu_custom_call.1} parent=5 // pred_region
        %s230 = ssub.s32 %s17, 2
        // Predicated region
        $region45: #{tpu_custom_call.1} parent=43 // pred_check
          %p231 = pneg %p114
        $region46: #{tpu_custom_call.1} parent=43 // pred_check_branch
          %233 = sbr.rel (%p231) target = $region48
        $region47: #{tpu_custom_call.1} parent=43 // pred_region
          %s234 = sand.u32 %s99, 1
          %s235 = scalar_lea.sflag [#allocation6], %s234
          %s236 = sand.u32 %s99, 1
          %s237 = smul.addr %s236, 16
          %s238 = scalar_lea.vmem [#allocation7], %s237
          %239 = dma.done %s235, 256
        $region48: #{tpu_custom_call.1} parent=43 // pred_fallthru
          _
      $region44: #{tpu_custom_call.1} parent=5 // pred_fallthru
        _
    $region6: #{tpu_custom_call.1} parent=1 // loop_footer
      %s21 = sadd.s32 1, %s17
    $region7: #{tpu_custom_call.1} parent=1 // loop_footer_branch
      %16 = sbr.rel target = $region3
    $region8: #{tpu_custom_call.1} parent=1 // loop_exit
      _
    %240 = vsyncpa [#allocation5], 1
    %s241 = scalar_lea.sflag [#allocation5], 1
    %242 = vsyncpa %s241, 1
    %243 = vsyncpa [#allocation6], 1
    %s244 = scalar_lea.sflag [#allocation6], 1
    %245 = vsyncpa %s244, 1

</llo_original>
